<compile_context>
chip_gen: v5e
topology: v5e:2x2
jax: 0.10.0
libtpu: 0.0.40
codegen_flags: <defaults>
</compile_context>

<pallas_src>
import functools

import jax
import jax.numpy as jnp
from jax.experimental import pallas as pl
from jax.experimental.pallas import tpu as pltpu


def rnf_kernel(xg_ref, w_hh_ref, feat_ref, *, kernel_size, hidden_dim, total_len):
    """LSTM recurrence over the K window timesteps for one block of batch rows.

    xg_ref   : (bb, L, 4H)  precomputed input projections x@W_ih + b (bf16 or
                            f32), gate order (i, f, o, g).  Window w of batch b
                            uses timesteps w .. w+K-1, all read via static
                            overlapping VMEM slices (no HBM duplication).
    w_hh_ref : (H, 4H)      hidden->gates weights (gate order i, f, o, g)
    feat_ref : (bb, T)      per-(batch, window) feature = max over hidden dim
                            of the final hidden state.
    """
    K = kernel_size
    H = hidden_dim
    T = total_len
    BB = xg_ref.shape[0]

    w_hh = w_hh_ref[...]                                    # (H, 4H), loaded once

    # bb is small & static -> unrolled; independent chains per batch element.
    for b in range(BB):
        h = jnp.zeros((T, H), jnp.float32)
        c = jnp.zeros((T, H), jnp.float32)

        # K is small & static -> unrolled; only h @ W_hh sits on the serial
        # chain.  (If K grows beyond ~8, switch to lax.fori_loop(unroll=True).)
        for t in range(K):
            # Window w needs timestep w + t for w = 0..T-1  ->  static slice.
            gates = xg_ref[b, t:t + T, :].astype(jnp.float32)        # (T, 4H)
            if t > 0:                                       # h == 0 at t == 0
                gates = gates + jnp.dot(h.astype(w_hh.dtype), w_hh,
                                        preferred_element_type=jnp.float32)
            sig = jax.nn.sigmoid(gates[:, :3 * H])          # i, f, o contiguous
            i_g = sig[:, 0 * H:1 * H]
            f_g = sig[:, 1 * H:2 * H]
            o_g = sig[:, 2 * H:3 * H]
            g_g = jnp.tanh(gates[:, 3 * H:])
            c = f_g * c + i_g * g_g
            h = o_g * jnp.tanh(c)

        # torch.max(cnnrnf, 2)[0] : max over hidden dim -> one value per window.
        feat_ref[b, :] = jnp.max(h, axis=-1)                # (T,)


def rnf_forward(tokens, emb_table, w_ih, w_hh, b, fc_w, fc_b, kernel_size,
                stream_dtype=jnp.bfloat16):
    """Full RNF forward.  Weight conventions (matching the pure-JAX reference):
       w_ih (E, 4H), w_hh (H, 4H), b (4H,) with torch gate order (i, f, g, o);
       fc_w (T, C), fc_b (C,).  stream_dtype: dtype used to ship xg / W_hh to
       the kernel (accumulation & activations always f32)."""
    # Embedding gather (padding_idx=0 honored via the zero row in emb_table).
    embed = jnp.take(emb_table, tokens, axis=0).astype(jnp.float32)   # (B, L, E)
    B, L, E = embed.shape
    H = w_hh.shape[0]
    C = fc_w.shape[1]
    K = kernel_size
    T = L - K + 1

    # Reorder gate columns (i, f, g, o) -> (i, f, o, g) so the kernel applies
    # sigmoid to one contiguous 3H slab and tanh to the trailing H slab.
    def reorder(x):
        i_c, f_c, g_c, o_c = jnp.split(x.astype(jnp.float32), 4, axis=-1)
        return jnp.concatenate([i_c, f_c, o_c, g_c], axis=-1)

    w_ih_r = reorder(w_ih)                                 # (E, 4H) f32
    w_hh_r = reorder(w_hh).astype(stream_dtype)            # (H, 4H) streamed
    b_r = reorder(b.reshape(1, 4 * H))                     # (1, 4H) f32

    # Input projection for ALL timesteps as ONE matmul (hoisted out of the
    # recurrence), computed in f32, streamed to the kernel once (no window
    # duplication) in the streaming dtype.
    xg = (embed.reshape(B * L, E) @ w_ih_r + b_r).reshape(B, L, 4 * H)
    xg = xg.astype(stream_dtype)

    # Batch-block size: keep the unrolled inner loop small, keep block rows
    # (bb*T) moderate, and guarantee >= 2 grid blocks when B >= 2 so the
    # "parallel" axis shards across both v7x TensorCores.
    bb = min(8, max(1, 512 // max(T, 1)))
    bb = min(bb, max(1, (B + 1) // 2))
    bb = max(1, min(bb, B))
    nblk = (B + bb - 1) // bb
    Bp = nblk * bb
    if Bp != B:
        # Padded rows: xg = 0 -> h = 0 -> feat = 0; sliced off before the fc.
        xg = jnp.pad(xg, ((0, Bp - B), (0, 0), (0, 0)))

    # Explicit VMEM budget (double-buffered xg block + weights + output block).
    itemsize = jnp.dtype(stream_dtype).itemsize
    blk_bytes = bb * L * 4 * H * itemsize
    w_bytes = H * 4 * H * itemsize
    out_bytes = bb * T * 4
    est = 2 * (blk_bytes + w_bytes + out_bytes)
    vmem_limit = int(min(64 << 20, max(32 << 20, 4 * est)))

    kernel = functools.partial(rnf_kernel, kernel_size=K, hidden_dim=H,
                               total_len=T)

    feats3 = pl.pallas_call(
        kernel,
        out_shape=jax.ShapeDtypeStruct((nblk, bb, T), jnp.float32),
        grid_spec=pltpu.PrefetchScalarGridSpec(
            num_scalar_prefetch=0,
            grid=(nblk,),
            in_specs=[
                pl.BlockSpec((bb, L, 4 * H), lambda i: (i, 0, 0)),
                pl.BlockSpec((H, 4 * H), lambda i: (0, 0)),
            ],
            out_specs=pl.BlockSpec((None, bb, T), lambda i: (i, 0, 0)),
        ),
        compiler_params=pltpu.CompilerParams(
            dimension_semantics=("parallel",),             # blocks independent
            vmem_limit_bytes=vmem_limit),
    )(xg, w_hh_r)                                          # (nblk, bb, T)

    # Tiny Linear(T -> C) on the (B, T) features stays in the wrapper.
    feats = feats3.reshape(Bp, T)[:B]                      # (B, T) f32
    return feats @ fc_w.astype(jnp.float32) + fc_b.reshape(1, C).astype(jnp.float32)


def rnf_reference(tokens, emb_table, w_ih, w_hh, b, fc_w, fc_b, kernel_size):
    """Pure-JAX f32 reference mirroring the PyTorch forward (gate order i,f,g,o)."""
    embed = jnp.take(emb_table, tokens, axis=0)            # (B, L, E)
    B, L, _ = embed.shape
    H = w_hh.shape[0]
    T = L - kernel_size + 1
    feats = []
    for i in range(T):
        h = jnp.zeros((B, H), jnp.float32)
        c = jnp.zeros((B, H), jnp.float32)
        for t in range(kernel_size):
            x_t = embed[:, i + t, :]
            gates = x_t @ w_ih + h @ w_hh + b
            i_g = jax.nn.sigmoid(gates[:, 0 * H:1 * H])
            f_g = jax.nn.sigmoid(gates[:, 1 * H:2 * H])
            g_g = jnp.tanh(gates[:, 2 * H:3 * H])
            o_g = jax.nn.sigmoid(gates[:, 3 * H:4 * H])
            c = f_g * c + i_g * g_g
            h = o_g * jnp.tanh(c)
        feats.append(jnp.max(h, axis=-1))
    feats = jnp.stack(feats, axis=1)                       # (B, T)
    return feats @ fc_w + fc_b


if __name__ == "__main__":
    # Small shapes consistent with the module's forward.
    B = 2            # batch
    MAX_LEN = 8      # sequence length
    K = 3            # kernel_size
    E = 16           # embedding_dim
    H = 32           # hidden_dim
    C = 5            # num_classes
    VOCAB = 20
    T = MAX_LEN - K + 1

    key = jax.random.PRNGKey(0)
    k_tok, k_emb, k_wih, k_whh, k_bih, k_bhh, k_fcw, k_fcb = jax.random.split(key, 8)

    tokens = jax.random.randint(k_tok, (B, MAX_LEN), 0, VOCAB, dtype=jnp.int32)

    # Deterministic synthetic parameters (nn.Embedding padding_idx=0 -> zero row).
    emb_table = 0.1 * jax.random.normal(k_emb, (VOCAB, E), jnp.float32)
    emb_table = emb_table.at[0].set(0.0)

    # LSTM params, torch gate order (i, f, g, o), stored as (in, 4H) / (H, 4H).
    w_ih = 0.1 * jax.random.normal(k_wih, (E, 4 * H), jnp.float32)
    w_hh = 0.1 * jax.random.normal(k_whh, (H, 4 * H), jnp.float32)
    b = (0.1 * jax.random.normal(k_bih, (4 * H,), jnp.float32)
         + 0.1 * jax.random.normal(k_bhh, (4 * H,), jnp.float32))

    # Final Linear(T -> C), stored transposed as (T, C).
    fc_w = 0.1 * jax.random.normal(k_fcw, (T, C), jnp.float32)
    fc_b = 0.1 * jax.random.normal(k_fcb, (C,), jnp.float32)

    ref = rnf_reference(tokens, emb_table, w_ih, w_hh, b, fc_w, fc_b, K)

    # f32 streaming path: bit-for-bit same math as the reference (tight check).
    out_f32 = rnf_forward(tokens, emb_table, w_ih, w_hh, b, fc_w, fc_b, K,
                          stream_dtype=jnp.float32)
    out_f32 = jax.block_until_ready(out_f32)
    assert out_f32.shape == (B, C)
    assert jnp.allclose(out_f32, ref, rtol=1e-3, atol=1e-3), (out_f32, ref)

    # bf16 streaming path (default, the HBM-optimized one): looser tolerance,
    # accumulation / activations remain f32.
    out_bf16 = rnf_forward(tokens, emb_table, w_ih, w_hh, b, fc_w, fc_b, K,
                           stream_dtype=jnp.bfloat16)
    out_bf16 = jax.block_until_ready(out_bf16)
    assert out_bf16.shape == (B, C)
    assert jnp.allclose(out_bf16, ref, rtol=5e-3, atol=5e-3), (out_bf16, ref)

    print("KERNEL_OK")
</pallas_src>

<mosaic_0001>
module attributes {stable_mosaic.version = 11 : i64} {
  func.func @rnf_kernel(%arg0: i32, %arg1: memref<1x8x128xf32, #tpu.memory_space<vmem>>, %arg2: memref<32x128xf32, #tpu.memory_space<vmem>>, %arg3: memref<1x1x6xf32, #tpu.memory_space<vmem>>) attributes {dimension_semantics = [#tpu.dimension_semantics<parallel>], iteration_bounds = array<i64: 2>, scalar_prefetch = 0 : i64, scratch_operands = 0 : i64, tpu.core_type = #tpu.core_type<tc>, window_params = [{transform_indices = @transform_0, window_bounds = array<i64: 1, 8, 128>}, {pipeline_mode = #tpu.pipeline_mode<synchronous>, transform_indices = @transform_1, window_bounds = array<i64: 32, 128>}, {transform_indices = @transform_2, window_bounds = array<i64: 1, 1, 6>}]} {
    %c0 = arith.constant 0 : index
    %c0_0 = arith.constant 0 : index
    %0 = vector.load %arg2[%c0, %c0_0] : memref<32x128xf32, #tpu.memory_space<vmem>>, vector<32x128xf32>
    %cst = arith.constant 0.000000e+00 : f32
    %1 = vector.broadcast %cst : f32 to vector<6x32xf32>
    %c0_1 = arith.constant 0 : index
    %c0_2 = arith.constant 0 : index
    %c0_3 = arith.constant 0 : index
    %2 = vector.load %arg1[%c0_1, %c0_2, %c0_3] : memref<1x8x128xf32, #tpu.memory_space<vmem>>, vector<1x6x128xf32>
    %3 = vector.shape_cast %2 : vector<1x6x128xf32> to vector<6x128xf32>
    %4 = vector.extract_strided_slice %3 {offsets = [0, 0], sizes = [6, 96], strides = [1, 1]} : vector<6x128xf32> to vector<6x96xf32>
    %5 = arith.negf %4 : vector<6x96xf32>
    %6 = math.exp %5 : vector<6x96xf32>
    %cst_4 = arith.constant 1.000000e+00 : f32
    %7 = vector.broadcast %cst_4 : f32 to vector<6x96xf32>
    %8 = arith.addf %7, %6 : vector<6x96xf32>
    %9 = arith.divf %7, %8 : vector<6x96xf32>
    %10 = vector.extract_strided_slice %9 {offsets = [0, 0], sizes = [6, 32], strides = [1, 1]} : vector<6x96xf32> to vector<6x32xf32>
    %11 = vector.extract_strided_slice %9 {offsets = [0, 32], sizes = [6, 32], strides = [1, 1]} : vector<6x96xf32> to vector<6x32xf32>
    %12 = vector.extract_strided_slice %9 {offsets = [0, 64], sizes = [6, 32], strides = [1, 1]} : vector<6x96xf32> to vector<6x32xf32>
    %13 = vector.extract_strided_slice %3 {offsets = [0, 96], sizes = [6, 32], strides = [1, 1]} : vector<6x128xf32> to vector<6x32xf32>
    %14 = math.tanh %13 : vector<6x32xf32>
    %15 = arith.mulf %11, %1 : vector<6x32xf32>
    %16 = arith.mulf %10, %14 : vector<6x32xf32>
    %17 = arith.addf %15, %16 : vector<6x32xf32>
    %18 = math.tanh %17 : vector<6x32xf32>
    %19 = arith.mulf %12, %18 : vector<6x32xf32>
    %c0_5 = arith.constant 0 : index
    %c1 = arith.constant 1 : index
    %c0_6 = arith.constant 0 : index
    %20 = vector.load %arg1[%c0_5, %c1, %c0_6] : memref<1x8x128xf32, #tpu.memory_space<vmem>>, vector<1x6x128xf32>
    %21 = vector.shape_cast %20 : vector<1x6x128xf32> to vector<6x128xf32>
    %cst_7 = arith.constant dense<0.000000e+00> : vector<6x128xf32>
    %22 = tpu.matmul %19, %0, %cst_7 {dimension_numbers = #tpu.dot_dimension_numbers<[1], [0], [0], [1], [0, 0, 1, 1], [], []>} : vector<6x32xf32>, vector<32x128xf32>, vector<6x128xf32> -> vector<6x128xf32>
    %23 = arith.addf %21, %22 : vector<6x128xf32>
    %24 = vector.extract_strided_slice %23 {offsets = [0, 0], sizes = [6, 96], strides = [1, 1]} : vector<6x128xf32> to vector<6x96xf32>
    %25 = arith.negf %24 : vector<6x96xf32>
    %26 = math.exp %25 : vector<6x96xf32>
    %cst_8 = arith.constant 1.000000e+00 : f32
    %27 = vector.broadcast %cst_8 : f32 to vector<6x96xf32>
    %28 = arith.addf %27, %26 : vector<6x96xf32>
    %29 = arith.divf %27, %28 : vector<6x96xf32>
    %30 = vector.extract_strided_slice %29 {offsets = [0, 0], sizes = [6, 32], strides = [1, 1]} : vector<6x96xf32> to vector<6x32xf32>
    %31 = vector.extract_strided_slice %29 {offsets = [0, 32], sizes = [6, 32], strides = [1, 1]} : vector<6x96xf32> to vector<6x32xf32>
    %32 = vector.extract_strided_slice %29 {offsets = [0, 64], sizes = [6, 32], strides = [1, 1]} : vector<6x96xf32> to vector<6x32xf32>
    %33 = vector.extract_strided_slice %23 {offsets = [0, 96], sizes = [6, 32], strides = [1, 1]} : vector<6x128xf32> to vector<6x32xf32>
    %34 = math.tanh %33 : vector<6x32xf32>
    %35 = arith.mulf %31, %17 : vector<6x32xf32>
    %36 = arith.mulf %30, %34 : vector<6x32xf32>
    %37 = arith.addf %35, %36 : vector<6x32xf32>
    %38 = math.tanh %37 : vector<6x32xf32>
    %39 = arith.mulf %32, %38 : vector<6x32xf32>
    %c0_9 = arith.constant 0 : index
    %c2 = arith.constant 2 : index
    %c0_10 = arith.constant 0 : index
    %40 = vector.load %arg1[%c0_9, %c2, %c0_10] : memref<1x8x128xf32, #tpu.memory_space<vmem>>, vector<1x6x128xf32>
    %41 = vector.shape_cast %40 : vector<1x6x128xf32> to vector<6x128xf32>
    %cst_11 = arith.constant dense<0.000000e+00> : vector<6x128xf32>
    %42 = tpu.matmul %39, %0, %cst_11 {dimension_numbers = #tpu.dot_dimension_numbers<[1], [0], [0], [1], [0, 0, 1, 1], [], []>} : vector<6x32xf32>, vector<32x128xf32>, vector<6x128xf32> -> vector<6x128xf32>
    %43 = arith.addf %41, %42 : vector<6x128xf32>
    %44 = vector.extract_strided_slice %43 {offsets = [0, 0], sizes = [6, 96], strides = [1, 1]} : vector<6x128xf32> to vector<6x96xf32>
    %45 = arith.negf %44 : vector<6x96xf32>
    %46 = math.exp %45 : vector<6x96xf32>
    %cst_12 = arith.constant 1.000000e+00 : f32
    %47 = vector.broadcast %cst_12 : f32 to vector<6x96xf32>
    %48 = arith.addf %47, %46 : vector<6x96xf32>
    %49 = arith.divf %47, %48 : vector<6x96xf32>
    %50 = vector.extract_strided_slice %49 {offsets = [0, 0], sizes = [6, 32], strides = [1, 1]} : vector<6x96xf32> to vector<6x32xf32>
    %51 = vector.extract_strided_slice %49 {offsets = [0, 32], sizes = [6, 32], strides = [1, 1]} : vector<6x96xf32> to vector<6x32xf32>
    %52 = vector.extract_strided_slice %49 {offsets = [0, 64], sizes = [6, 32], strides = [1, 1]} : vector<6x96xf32> to vector<6x32xf32>
    %53 = vector.extract_strided_slice %43 {offsets = [0, 96], sizes = [6, 32], strides = [1, 1]} : vector<6x128xf32> to vector<6x32xf32>
    %54 = math.tanh %53 : vector<6x32xf32>
    %55 = arith.mulf %51, %37 : vector<6x32xf32>
    %56 = arith.mulf %50, %54 : vector<6x32xf32>
    %57 = arith.addf %55, %56 : vector<6x32xf32>
    %58 = math.tanh %57 : vector<6x32xf32>
    %59 = arith.mulf %52, %58 : vector<6x32xf32>
    %cst_13 = arith.constant dense<0xFF800000> : vector<6xf32>
    %60 = vector.multi_reduction <maximumf>, %59, %cst_13 [1] : vector<6x32xf32> to vector<6xf32>
    %c0_14 = arith.constant 0 : index
    %c0_15 = arith.constant 0 : index
    %c0_16 = arith.constant 0 : index
    %61 = vector.load %arg3[%c0_14, %c0_15, %c0_16] : memref<1x1x6xf32, #tpu.memory_space<vmem>>, vector<1x1x6xf32>
    %62 = vector.shape_cast %61 : vector<1x1x6xf32> to vector<6xf32>
    %63 = vector.shape_cast %60 : vector<6xf32> to vector<1x1x6xf32>
    tpu.vector_store %arg3[%c0_14, %c0_15, %c0_16], %63 {strides = array<i32>} : memref<1x1x6xf32, #tpu.memory_space<vmem>>, vector<1x1x6xf32>,
    return
  }
  func.func @transform_0(%arg0: i32) -> (i32, i32, i32) {
    %c0_i32 = arith.constant 0 : i32
    %c0_i32_0 = arith.constant 0 : i32
    %c0_i32_1 = arith.constant 0 : i32
    return %arg0, %c0_i32, %c0_i32_0 : i32, i32, i32
  }
  func.func @transform_1(%arg0: i32) -> (i32, i32) {
    %c0_i32 = arith.constant 0 : i32
    %c0_i32_0 = arith.constant 0 : i32
    %c0_i32_1 = arith.constant 0 : i32
    return %c0_i32, %c0_i32_0 : i32, i32
  }
  func.func @transform_2(%arg0: i32) -> (i32, i32, i32) {
    %c0_i32 = arith.constant 0 : i32
    %c0_i32_0 = arith.constant 0 : i32
    %c0_i32_1 = arith.constant 0 : i32
    return %arg0, %c0_i32, %c0_i32_0 : i32, i32, i32
  }
}

</mosaic_0001>

<llo_original>
// kernel: tpu_custom_call.1
$region0: #{tpu_custom_call.1}
  #allocation0 [shape = 'u32[]', space=smem, size = 0x4, offset = 0x4, fixed_abs, tag = 'smem constant byte address 0x4 - core index']
  #allocation1 [shape = 'u32[72,128]{1,0:T(1,128)}', space=vmem, size = 0x9000, scoped, tag = 'internal scratch']
  %s0 = inlined_call_operand.hbm [shape: f32[2,8,128], index: 0, kind: input, shape index: {}]
  %s1 = inlined_call_operand.hbm [shape: f32[32,128], index: 1, kind: input, shape index: {}]
  %s2 = inlined_call_operand.hbm [shape: f32[2,1,6], index: 2, kind: output, shape index: {}]
  %s3 = sld [smem:[#allocation0]]
  $region49: #{tpu_custom_call.1} parent=0
    _
  %s5 = ssub.s32 1, %s3
  %s6 = scalar_select 0, %s5, %s3
  $region1: #{tpu_custom_call.1} parent=0
    #allocation2 [shape = 'u8[8192]{0}', space=vmem, size = 0x2000, scoped, tag = 'input window, operand 0']
    #allocation3 [shape = 's32[2]{0}', space=sflag, size = 0x8, scoped, tag = 'scoped memory for tpu_custom_call.1']
    #allocation4 [shape = 's32[2]{0}', space=sflag, size = 0x8, scoped, tag = 'scoped memory for tpu_custom_call.1']
    #allocation5 [shape = 'u8[16384]{0}', space=vmem, size = 0x4000, scoped, tag = 'input window, operand 1, single buffered']
    #allocation6 [shape = 's32[1]{0}', space=sflag, size = 0x4, scoped, tag = 'scoped memory for tpu_custom_call.1']
    #allocation7 [shape = 'u8[1024]{0}', space=vmem, size = 0x400, scoped, tag = 'output window, operand 0']
    %7 = vsyncpa [#allocation3], 0
    %s8 = scalar_lea.sflag [#allocation3], 1
    %9 = vsyncpa %s8, 0
    %10 = vsyncpa [#allocation6], 0
    %11 = vsyncpa [#allocation4], 0
    %s12 = scalar_lea.sflag [#allocation4], 1
    %13 = vsyncpa %s12, 0
    loop: start=0, step=1, limit=4
    $region2: #{tpu_custom_call.1} parent=1 // loop_pre_header
      _
    $region3: #{tpu_custom_call.1} parent=1 // loop_header
      %s15 = sphi 0, %s19
      %p16 = scmp.ge.s32.totalorder %s15, 4
      %s25 = sphi 0, %s27
      %s28 = sphi 0, %s25
      %s29 = sphi 0, %s28
      %s45 = sphi 0, %s29
      %s49 = sphi 0, %s49
      %s51 = sphi 0, %s49
      %s52 = sphi 0, %s51
      %s66 = sphi 0, %s52
      %s72 = sphi 0, %s74
      %s75 = sphi 0, %s72
      %s76 = sphi 0, %s75
      %s92 = sphi 0, %s76
    $region4: #{tpu_custom_call.1} parent=1 // loop_header_branch
      %18 = sbr.rel (%p16) target = $region8
    $region5: #{tpu_custom_call.1} parent=1 // loop_body
      %s20 = ssub.s32 %s15, 1
      %s21 = ssub.s32 %s15, 2
      %s22 = sadd.s32 %s15, 1
      %s23 = ssub.s32 %s15, %s22
      %p24 = scmp.eq.s32.totalorder %s23, 0
      %s26 = sadd.s32 %s25, 1
      %s27 = scalar_select %p24, %s25, %s26
      %p30 = pneg %p24
      %p31 = scmp.eq.s32.totalorder %s15, 1
      %p32 = por %p30, %p31
      %p33 = scmp.ne.s32.totalorder %s25, %s28
      %p34 = scmp.eq.s32.totalorder %s15, 0
      %p35 = por %p33, %p34
      %p36 = scmp.ne.s32.totalorder %s25, %s28
      %p37 = scmp.eq.s32.totalorder %s20, 1
      %p38 = por %p36, %p37
      %p39 = scmp.ne.s32.totalorder %s28, %s29
      %p40 = scmp.eq.s32.totalorder %s20, 0
      %p41 = por %p39, %p40
      %p42 = scmp.ne.s32.totalorder %s28, %s29
      %p43 = scmp.eq.s32.totalorder %s21, 1
      %p44 = por %p42, %p43
      %p46 = scmp.ne.s32.totalorder %s29, %s45
      %p47 = scmp.eq.s32.totalorder %s21, 0
      %p48 = por %p46, %p47
      %s50 = sadd.s32 %s49, 1
      %p53 = scmp.eq.s32.totalorder %s15, 1
      %p54 = scmp.ne.s32.totalorder %s49, %s51
      %p55 = scmp.eq.s32.totalorder %s15, 0
      %p56 = por %p54, %p55
      %p57 = scmp.ne.s32.totalorder %s49, %s51
      %p58 = scmp.eq.s32.totalorder %s20, 1
      %p59 = por %p57, %p58
      %p60 = scmp.ne.s32.totalorder %s51, %s52
      %p61 = scmp.eq.s32.totalorder %s20, 0
      %p62 = por %p60, %p61
      %p63 = scmp.ne.s32.totalorder %s51, %s52
      %p64 = scmp.eq.s32.totalorder %s21, 1
      %p65 = por %p63, %p64
      %p67 = scmp.ne.s32.totalorder %s52, %s66
      %p68 = scmp.eq.s32.totalorder %s21, 0
      %p69 = por %p67, %p68
      %s70 = ssub.s32 %s15, %s22
      %p71 = scmp.eq.s32.totalorder %s70, 0
      %s73 = sadd.s32 %s72, 1
      %s74 = scalar_select %p71, %s72, %s73
      %p77 = pneg %p71
      %p78 = scmp.eq.s32.totalorder %s15, 1
      %p79 = por %p77, %p78
      %p80 = scmp.ne.s32.totalorder %s72, %s75
      %p81 = scmp.eq.s32.totalorder %s15, 0
      %p82 = por %p80, %p81
      %p83 = scmp.ne.s32.totalorder %s72, %s75
      %p84 = scmp.eq.s32.totalorder %s20, 1
      %p85 = por %p83, %p84
      %p86 = scmp.ne.s32.totalorder %s75, %s76
      %p87 = scmp.eq.s32.totalorder %s20, 0
      %p88 = por %p86, %p87
      %p89 = scmp.ne.s32.totalorder %s75, %s76
      %p90 = scmp.eq.s32.totalorder %s21, 1
      %p91 = por %p89, %p90
      %p93 = scmp.ne.s32.totalorder %s76, %s92
      %p94 = scmp.eq.s32.totalorder %s21, 0
      %p95 = por %p93, %p94
      %p96 = scmp.le.s32.totalorder 1, %s15
      %p97 = scmp.lt.s32.totalorder %s15, 3
      %p98 = pnand %p96, %p97
      %p99 = pneg %p98
      // Predicated region
      $region9: #{tpu_custom_call.1} parent=5 // pred_check
        _
      $region10: #{tpu_custom_call.1} parent=5 // pred_check_branch
        %101 = sbr.rel (%p98) target = $region12
      $region11: #{tpu_custom_call.1} parent=5 // pred_region
        %s102 = ssub.s32 %s15, 1
        // Predicated region
        $region13: #{tpu_custom_call.1} parent=11 // pred_check
          %p103 = pneg %p62
        $region14: #{tpu_custom_call.1} parent=11 // pred_check_branch
          %105 = sbr.rel (%p103) target = $region16
        $region15: #{tpu_custom_call.1} parent=11 // pred_region
          %107 = vsyncadd [#allocation6], 0
          %s108 = sshll.u32 %s1, 4
          %s109 = int_to_ptr.hbm [resolvable:$true] %s108
          %s110 = sshll.u32 [#allocation5], 4
          %s111 = int_to_ptr.vmem [resolvable:$true] %s110
          %116 = dma.hbm_to_vmem [thread:$0]  %s109, 512, %s111, [#allocation6], 128, 128, 8
        $region16: #{tpu_custom_call.1} parent=11 // pred_fallthru
          _
      $region12: #{tpu_custom_call.1} parent=5 // pred_fallthru
        _
      %p117 = scmp.lt.s32.totalorder %s15, 2
      // Predicated region
      $region17: #{tpu_custom_call.1} parent=5 // pred_check
        %p118 = pneg %p117
      $region18: #{tpu_custom_call.1} parent=5 // pred_check_branch
        %120 = sbr.rel (%p118) target = $region20
      $region19: #{tpu_custom_call.1} parent=5 // pred_region
        // Predicated region
        $region21: #{tpu_custom_call.1} parent=19 // pred_check
          %p121 = pneg %p35
        $region22: #{tpu_custom_call.1} parent=19 // pred_check_branch
          %123 = sbr.rel (%p121) target = $region24
        $region23: #{tpu_custom_call.1} parent=19 // pred_region
          %s124 = sand.u32 %s25, 1
          %s125 = scalar_lea.sflag [#allocation3], %s124
          %s126 = sand.u32 %s25, 1
          %s127 = smul.addr %s126, 8
          %s128 = scalar_lea.vmem [#allocation2], %s127
          %130 = vsyncadd %s125, 0
          %s131 = smul.addr %s15, 8
          %s132 = scalar_lea.hbm %s0, %s131
          %s134 = sshll.u32 %s132, 4
          %s135 = int_to_ptr.hbm [resolvable:$true] %s134
          %s136 = sshll.u32 %s128, 4
          %s137 = int_to_ptr.vmem [resolvable:$true] %s136
          %139 = dma.hbm_to_vmem [thread:$0]  %s135, 128, %s137, %s125
        $region24: #{tpu_custom_call.1} parent=19 // pred_fallthru
          _
      $region20: #{tpu_custom_call.1} parent=5 // pred_fallthru
        _
      %p140 = scmp.le.s32.totalorder 1, %s15
      %p141 = scmp.lt.s32.totalorder %s15, 3
      %p142 = pnand %p140, %p141
      %p143 = pneg %p142
      // Predicated region
      $region25: #{tpu_custom_call.1} parent=5 // pred_check
        _
      $region26: #{tpu_custom_call.1} parent=5 // pred_check_branch
        %145 = sbr.rel (%p142) target = $region28
      $region27: #{tpu_custom_call.1} parent=5 // pred_region
        %s146 = ssub.s32 %s15, 1
        %s147 = sand.u32 %s28, 1
        %s148 = scalar_lea.sflag [#allocation3], %s147
        %s149 = sand.u32 %s28, 1
        %s150 = smul.addr %s149, 8
        %s151 = scalar_lea.vmem [#allocation2], %s150
        // Predicated region
        $region29: #{tpu_custom_call.1} parent=27 // pred_check
          %p152 = pneg %p41
        $region30: #{tpu_custom_call.1} parent=27 // pred_check_branch
          %154 = sbr.rel (%p152) target = $region32
        $region31: #{tpu_custom_call.1} parent=27 // pred_region
          %156 = dma.done %s148, 128
        $region32: #{tpu_custom_call.1} parent=27 // pred_fallthru
          _
        // Predicated region
        $region33: #{tpu_custom_call.1} parent=27 // pred_check
          %p157 = pneg %p62
        $region34: #{tpu_custom_call.1} parent=27 // pred_check_branch
          %159 = sbr.rel (%p157) target = $region36
        $region35: #{tpu_custom_call.1} parent=27 // pred_region
          %161 = dma.done [#allocation6], 512
        $region36: #{tpu_custom_call.1} parent=27 // pred_fallthru
          _
        %s162 = sand.u32 %s28, 1
        %s163 = scalar_lea.sflag [#allocation3], %s162
        %s164 = sand.u32 %s28, 1
        %s165 = smul.addr %s164, 8
        %s166 = scalar_lea.vmem [#allocation2], %s165
        %p167 = pneg %p41
        %p168 = pneg %p38
        %p169 = pneg %p62
        %p170 = pneg %p59
        %p171 = pneg %p88
        %p172 = pneg %p85
        %s173 = sand.u32 %s75, 1
        %s174 = scalar_lea.sflag [#allocation4], %s173
        %s175 = sand.u32 %s75, 1
        %s176 = scalar_lea.vmem [#allocation7], %s175
        %v177 = vld [vmem:[#allocation5] sm:$0xff]
        %v178 = vld [vmem:[#allocation5 + $0x8] sm:$0xff]
        %v179 = vld [vmem:[#allocation5 + $0x10] sm:$0xff]
        %v180 = vld [vmem:[#allocation5 + $0x18] sm:$0xff]
        %v181 = vld [vmem:[%s151] sm:$0x3f]
        %v182 = vxor.u32 %v181, 2147483648
        %v183 = vmul.f32 %v182, 1.442695
        %v184 = vpow.pop %v183
        %v185 = vadd.f32 %v184, 1.0
        %v186 = vrcp.pop %v185
        %v187 = vmul.f32 %v185, %v186
        %v188 = vsub.f32 1.0, %v187
        %v189 = vmul.f32 %v186, %v188
        %v190 = vadd.f32 %v186, %v189
        %vm191 = vweird.f32 %v185
        %vm192 = vweird.f32 %v186
        %vm193 = vmor %vm191, %vm192
        %v194 = vsel %vm193, %v186, %v190
        %v195 = vand.u32 2147483647, %v185
        %vm196 = vcmp.eq.f32.partialorder %v195, 8.507059e+37
        %v197 = vand.u32 %v185, 2147483648
        %v198 = vor.u32 1.1754944e-38, %v197
        %v199 = vsel %vm196, %v198, %v194
        %v200 = vmul.f32 1.0, %v199
        %v201 = vtanh.pop %v181
        %v202 = vmul.f32 %v200, 0.0
        %204 = vrot.lane.b32.xlu0 %v201, 32
        %v205 = vpop.permute.xlu0 %204
        %v207 = vmul.f32 %v200, %v205
        %209 = vrot.lane.b32.xlu0 %v207, 32
        %v210 = vpop.permute.xlu0 %209
        %v212 = vadd.f32 %v202, %v210
        %v213 = vtanh.pop %v212
        %215 = vrot.lane.b32.xlu0 %v213, 32
        %v216 = vpop.permute.xlu0 %215
        %v218 = vmul.f32 %v200, %v216
        %v219 = vld [vmem:[%s151 + $0x1] sm:$0x3f]
        %221 = vrot.lane.b32.xlu0 %v218, 64
        %v222 = vpop.permute.xlu0 %221
        %vm223 = vcmask 261120
        %v224 = vsel %vm223, %v222, 0
        %226 = vmatpush.msra.mxu0 0.0
        %227 = vmatpush.msra.mxu0 0.0
        %228 = vmatpush.msra.mxu0 0.0
        %229 = vmatpush.msra.mxu0 0.0
        %230 = vmatpush.msra.mxu0 0.0
        %231 = vmatpush.msra.mxu0 0.0
        %232 = vmatpush.msra.mxu0 0.0
        %233 = vmatpush.msra.mxu0 0.0
        %234 = vmatpush.msra.mxu0 0.0
        %235 = vmatpush.msra.mxu0 0.0
        %236 = vmatpush.msra.mxu0 0.0
        %237 = vmatpush.msra.mxu0 0.0
        %238 = vmatpush.msra.mxu0 %v180
        %239 = vmatpush.msra.mxu0 %v179
        %240 = vmatpush.msra.mxu0 %v178
        %241 = vmatpush.msra.mxu0 %v177
        %242 = vmatmul.f32.gmra.mxu0 %v224
        %v243 = vpop.f32.mrf.mxu0
        %v244 = vadd.f32 0.0, %v243
        %245 = vdwg.mxu0
        %v246 = vadd.f32 %v219, %v244
        %v247 = vxor.u32 %v246, 2147483648
        %v248 = vmul.f32 %v247, 1.442695
        %v249 = vpow.pop %v248
        %v250 = vadd.f32 %v249, 1.0
        %v251 = vrcp.pop %v250
        %v252 = vmul.f32 %v250, %v251
        %v253 = vsub.f32 1.0, %v252
        %v254 = vmul.f32 %v251, %v253
        %v255 = vadd.f32 %v251, %v254
        %vm256 = vweird.f32 %v250
        %vm257 = vweird.f32 %v251
        %vm258 = vmor %vm256, %vm257
        %v259 = vsel %vm258, %v251, %v255
        %v260 = vand.u32 2147483647, %v250
        %vm261 = vcmp.eq.f32.partialorder %v260, 8.507059e+37
        %v262 = vand.u32 %v250, 2147483648
        %v263 = vor.u32 1.1754944e-38, %v262
        %v264 = vsel %vm261, %v263, %v259
        %v265 = vmul.f32 1.0, %v264
        %v266 = vtanh.pop %v246
        %v267 = vmul.f32 %v265, %v212
        %269 = vrot.lane.b32.xlu0 %v266, 32
        %v270 = vpop.permute.xlu0 %269
        %v272 = vmul.f32 %v265, %v270
        %274 = vrot.lane.b32.xlu0 %v272, 32
        %v275 = vpop.permute.xlu0 %274
        %v277 = vadd.f32 %v267, %v275
        %v278 = vtanh.pop %v277
        %280 = vrot.lane.b32.xlu0 %v278, 32
        %v281 = vpop.permute.xlu0 %280
        %v283 = vmul.f32 %v265, %v281
        %v284 = vld [vmem:[%s151 + $0x2] sm:$0x3f]
        %286 = vrot.lane.b32.xlu0 %v283, 64
        %v287 = vpop.permute.xlu0 %286
        %v288 = vsel %vm223, %v287, 0
        %290 = vmatpush.msra.mxu0 0.0
        %291 = vmatpush.msra.mxu0 0.0
        %292 = vmatpush.msra.mxu0 0.0
        %293 = vmatpush.msra.mxu0 0.0
        %294 = vmatpush.msra.mxu0 0.0
        %295 = vmatpush.msra.mxu0 0.0
        %296 = vmatpush.msra.mxu0 0.0
        %297 = vmatpush.msra.mxu0 0.0
        %298 = vmatpush.msra.mxu0 0.0
        %299 = vmatpush.msra.mxu0 0.0
        %300 = vmatpush.msra.mxu0 0.0
        %301 = vmatpush.msra.mxu0 0.0
        %302 = vmatpush.msra.mxu0 %v180
        %303 = vmatpush.msra.mxu0 %v179
        %304 = vmatpush.msra.mxu0 %v178
        %305 = vmatpush.msra.mxu0 %v177
        %306 = vmatmul.f32.gmra.mxu0 %v288
        %v307 = vpop.f32.mrf.mxu0
        %v308 = vadd.f32 0.0, %v307
        %309 = vdwg.mxu0
        %v310 = vadd.f32 %v284, %v308
        %v311 = vxor.u32 %v310, 2147483648
        %v312 = vmul.f32 %v311, 1.442695
        %v313 = vpow.pop %v312
        %v314 = vadd.f32 %v313, 1.0
        %v315 = vrcp.pop %v314
        %v316 = vmul.f32 %v314, %v315
        %v317 = vsub.f32 1.0, %v316
        %v318 = vmul.f32 %v315, %v317
        %v319 = vadd.f32 %v315, %v318
        %vm320 = vweird.f32 %v314
        %vm321 = vweird.f32 %v315
        %vm322 = vmor %vm320, %vm321
        %v323 = vsel %vm322, %v315, %v319
        %v324 = vand.u32 2147483647, %v314
        %vm325 = vcmp.eq.f32.partialorder %v324, 8.507059e+37
        %v326 = vand.u32 %v314, 2147483648
        %v327 = vor.u32 1.1754944e-38, %v326
        %v328 = vsel %vm325, %v327, %v323
        %v329 = vmul.f32 1.0, %v328
        %v330 = vtanh.pop %v310
        %v331 = vmul.f32 %v329, %v277
        %333 = vrot.lane.b32.xlu0 %v330, 32
        %v334 = vpop.permute.xlu0 %333
        %v336 = vmul.f32 %v329, %v334
        %338 = vrot.lane.b32.xlu0 %v336, 32
        %v339 = vpop.permute.xlu0 %338
        %v341 = vadd.f32 %v331, %v339
        %v342 = vtanh.pop %v341
        %344 = vrot.lane.b32.xlu0 %v342, 32
        %v345 = vpop.permute.xlu0 %344
        %v347 = vmul.f32 %v329, %v345
        %vm348 = vcmask 783872
        %v349 = vsel %vm348, %v347, -inf
        %350 = vmax.xlane.f32.xlu0 %v349
        %v351 = vpop.xlane.xlu0 %350
        %v353 = vlaneseq
        %v354 = vand.u32 %v353, 127
        %v355 = vperm.slane %v351, %v354
        %vm357 = vcmask 40960
        %358 = vst.msk [vmem:[%s176] sm:$0x1] %vm357, %v355
        %s359 = sand.u32 %s75, 1
        %s360 = scalar_lea.sflag [#allocation4], %s359
        %s361 = sand.u32 %s75, 1
        %s362 = scalar_lea.vmem [#allocation7], %s361
        // Predicated region
        $region37: #{tpu_custom_call.1} parent=27 // pred_check
          %p363 = pneg %p85
        $region38: #{tpu_custom_call.1} parent=27 // pred_check_branch
          %365 = sbr.rel (%p363) target = $region40
        $region39: #{tpu_custom_call.1} parent=27 // pred_region
          %367 = vsyncadd %s360, 0
          %s368 = scalar_lea.hbm %s2, %s20
          %s370 = sshll.u32 %s362, 4
          %s371 = int_to_ptr.vmem [resolvable:$true] %s370
          %s372 = sshll.u32 %s368, 4
          %s373 = int_to_ptr.hbm [resolvable:$true] %s372
          %375 = dma.vmem_to_hbm [thread:$0]  %s371, 16, %s373, %s360
        $region40: #{tpu_custom_call.1} parent=27 // pred_fallthru
          _
      $region28: #{tpu_custom_call.1} parent=5 // pred_fallthru
        _
      %p376 = scmp.le.s32.totalorder 2, %s15
      // Predicated region
      $region41: #{tpu_custom_call.1} parent=5 // pred_check
        %p377 = pneg %p376
      $region42: #{tpu_custom_call.1} parent=5 // pred_check_branch
        %379 = sbr.rel (%p377) target = $region44
      $region43: #{tpu_custom_call.1} parent=5 // pred_region
        %s380 = ssub.s32 %s15, 2
        // Predicated region
        $region45: #{tpu_custom_call.1} parent=43 // pred_check
          %p381 = pneg %p91
        $region46: #{tpu_custom_call.1} parent=43 // pred_check_branch
          %383 = sbr.rel (%p381) target = $region48
        $region47: #{tpu_custom_call.1} parent=43 // pred_region
          %s384 = sand.u32 %s76, 1
          %s385 = scalar_lea.sflag [#allocation4], %s384
          %s386 = sand.u32 %s76, 1
          %s387 = scalar_lea.vmem [#allocation7], %s386
          %389 = dma.done %s385, 16
        $region48: #{tpu_custom_call.1} parent=43 // pred_fallthru
          _
      $region44: #{tpu_custom_call.1} parent=5 // pred_fallthru
        _
    $region6: #{tpu_custom_call.1} parent=1 // loop_footer
      %s19 = sadd.s32 1, %s15
    $region7: #{tpu_custom_call.1} parent=1 // loop_footer_branch
      %14 = sbr.rel target = $region3
    $region8: #{tpu_custom_call.1} parent=1 // loop_exit
      _
    %390 = vsyncpa [#allocation3], 1
    %s391 = scalar_lea.sflag [#allocation3], 1
    %392 = vsyncpa %s391, 1
    %393 = vsyncpa [#allocation6], 1
    %394 = vsyncpa [#allocation4], 1
    %s395 = scalar_lea.sflag [#allocation4], 1
    %396 = vsyncpa %s395, 1

</llo_original>
